<compile_context>
chip_gen: v5e
topology: v5e:2x2
jax: 0.10.0
libtpu: 0.0.40
codegen_flags: <defaults>
</compile_context>

<pallas_src>
import functools

import jax
import jax.numpy as jnp
from jax import lax
from jax.experimental import pallas as pl
from jax.experimental.pallas import tpu as pltpu

_LANE = 128
_S_TILE_TARGET = 4096           # lane-dense spatial tile target (VMEM-budgeted)
_VMEM_LIMIT = 48 * 1024 * 1024  # > v5e 16 MiB scoped default, <= v7x physical


def _round_up(x, m):
    return -(-x // m) * m


# --------------------------------------------------------------------------
# Kernels
# --------------------------------------------------------------------------
def _asc_shift_kernel(cur_ref, halo_ref, wf_ref, bf_ref, o_ref, buf_ref, *,
                      K, dilation, Wp, S_tile, precision):
    # cur_ref : (C, S_tile)       current flat-spatial block of the padded input
    # halo_ref: (C, HALO)         first HALO lanes of the *next* block (same array)
    # wf_ref  : (K*K, Cout, C)    fused per-tap weights  pw[o,c] * dw[c,kh,kw]
    # bf_ref  : (Cout, 1) f32     fused bias  pw @ dw_bias + pw_bias
    # o_ref   : (Cout, S_tile)    lane-dense output block
    # buf_ref : (C, S_tile+HALO)  VMEM scratch: current block ++ halo
    buf_ref[:, :S_tile] = cur_ref[...]
    buf_ref[:, S_tile:] = halo_ref[...]

    acc = None
    for kh in range(K):
        for kw in range(K):
            t = kh * K + kw
            shift = kh * dilation * Wp + kw * dilation       # static flat shift
            win = buf_ref[:, shift:shift + S_tile]           # (C, S_tile)
            part = jnp.dot(wf_ref[t], win,
                           preferred_element_type=jnp.float32,
                           precision=precision)              # MXU, f32 acc
            acc = part if acc is None else acc + part
    o_ref[...] = (acc + bf_ref[...]).astype(o_ref.dtype)


def _asc_matmul_kernel(xt_ref, w_ref, b_ref, o_ref, *, precision):
    # Fallback (stride > 1): xt_ref (K*K*C, S_tile) im2col taps,
    # w_ref (Cout, K*K*C) fused weights, b_ref (Cout, 1) fused bias.
    out = jnp.dot(w_ref[...], xt_ref[...],
                  preferred_element_type=jnp.float32, precision=precision)
    o_ref[...] = (out + b_ref[...]).astype(o_ref.dtype)


# --------------------------------------------------------------------------
# Wrappers
# --------------------------------------------------------------------------
def _fuse_weights(dw_weight, dw_bias, pw_weight, pw_bias, compute_dtype):
    C = dw_weight.shape[0]
    K = dw_weight.shape[-1]
    Cout = pw_weight.shape[0]
    dwt = dw_weight.reshape(C, K * K).T.astype(jnp.float32)          # (K*K, C)
    pw2 = pw_weight.reshape(Cout, C).astype(jnp.float32)             # (Cout, C)
    wf = (dwt[:, None, :] * pw2[None, :, :]).astype(compute_dtype)   # (K*K, Cout, C)
    bf = (pw2 @ dw_bias.astype(jnp.float32)
          + pw_bias.astype(jnp.float32)).reshape(Cout, 1)            # (Cout, 1) f32
    return wf, bf


def _asc_stride1(x, dw_weight, dw_bias, pw_weight, pw_bias, *,
                 padding, dilation, compute_dtype):
    N, C, H, W = x.shape
    Cout = pw_weight.shape[0]
    K = dw_weight.shape[-1]
    d = dilation
    Hp, Wp = H + 2 * padding, W + 2 * padding
    Ho, Wo = Hp - d * (K - 1), Wp - d * (K - 1)
    L_in, L_out = Hp * Wp, Ho * Wp      # output kept on the Wp-wide "fake flat" grid

    # Tap (kh,kw) of output flat index j = ho*Wp + wo reads flat index
    # j + (kh*d*Wp + kw*d); the max shift bounds the required halo.
    max_shift = d * (K - 1) * (Wp + 1)
    halo = max(_LANE, _round_up(max_shift, _LANE))
    s_tile = _round_up(min(_S_TILE_TARGET, _round_up(L_out, _LANE)), halo)
    sp_out = _round_up(L_out, s_tile)
    sp_in = max(_round_up(L_in, s_tile), sp_out)

    x_pad = jnp.pad(x, ((0, 0), (0, 0), (padding, padding), (padding, padding)))
    xf = x_pad.reshape(N, C, L_in).astype(compute_dtype)
    xf = jnp.pad(xf, ((0, 0), (0, 0), (0, sp_in - L_in)))

    wf, bf = _fuse_weights(dw_weight, dw_bias, pw_weight, pw_bias, compute_dtype)

    n_blocks = sp_out // s_tile
    n_halo_blocks = sp_in // halo
    blocks_per_tile = s_tile // halo
    precision = (lax.Precision.HIGHEST
                 if jnp.dtype(compute_dtype) == jnp.dtype(jnp.float32)
                 else lax.Precision.DEFAULT)
    kernel = functools.partial(_asc_shift_kernel, K=K, dilation=d, Wp=Wp,
                               S_tile=s_tile, precision=precision)

    # TODO(synk): tile Cout / the K*K*C contraction to MXU-native sizes for
    # very large channel counts (weights are kept fully resident here).
    out_flat = pl.pallas_call(
        kernel,
        out_shape=jax.ShapeDtypeStruct((N, Cout, sp_out), jnp.float32),
        grid_spec=pltpu.PrefetchScalarGridSpec(
            num_scalar_prefetch=0,
            grid=(N, n_blocks),
            in_specs=[
                # current spatial block of the flattened padded input
                pl.BlockSpec((None, C, s_tile), lambda n, b: (n, 0, b)),
                # small halo: first `halo` lanes of the next block (same array)
                pl.BlockSpec(
                    (None, C, halo),
                    lambda n, b: (n, 0, jnp.minimum((b + 1) * blocks_per_tile,
                                                    n_halo_blocks - 1))),
                pl.BlockSpec((K * K, Cout, C), lambda n, b: (0, 0, 0)),
                pl.BlockSpec((Cout, 1), lambda n, b: (0, 0)),
            ],
            out_specs=pl.BlockSpec((None, Cout, s_tile), lambda n, b: (n, 0, b)),
            scratch_shapes=[pltpu.VMEM((C, s_tile + halo), compute_dtype)],
        ),
        compiler_params=pltpu.CompilerParams(
            dimension_semantics=("parallel", "parallel"),
            vmem_limit_bytes=_VMEM_LIMIT,
        ),
    )(xf, xf, wf, bf)

    # keep ho < Ho rows and wo < Wo lanes of the Wp-wide flat output
    return out_flat[:, :, :L_out].reshape(N, Cout, Ho, Wp)[:, :, :, :Wo]


def _asc_general(x, dw_weight, dw_bias, pw_weight, pw_bias, *,
                 stride, padding, dilation, compute_dtype):
    # TODO(synk): stride > 1 still materializes the K*K taps (im2col) in HBM;
    # the flat-shift fast path above only covers stride == 1.
    N, C, H, W = x.shape
    Cout = pw_weight.shape[0]
    K = dw_weight.shape[-1]
    d, s = dilation, stride
    Hp, Wp = H + 2 * padding, W + 2 * padding
    Ho = (Hp - d * (K - 1) - 1) // s + 1
    Wo = (Wp - d * (K - 1) - 1) // s + 1
    S = Ho * Wo

    x_pad = jnp.pad(x, ((0, 0), (0, 0), (padding, padding), (padding, padding)))
    taps = []
    for kh in range(K):
        for kw in range(K):
            h0, w0 = kh * d, kw * d
            taps.append(x_pad[:, :, h0:h0 + (Ho - 1) * s + 1:s,
                                    w0:w0 + (Wo - 1) * s + 1:s])
    xt = jnp.stack(taps, axis=1).reshape(N, K * K * C, S).astype(compute_dtype)

    s_tile = _round_up(min(_S_TILE_TARGET, _round_up(S, _LANE)), _LANE)
    sp = _round_up(S, s_tile)
    if sp != S:
        xt = jnp.pad(xt, ((0, 0), (0, 0), (0, sp - S)))

    wf, bf = _fuse_weights(dw_weight, dw_bias, pw_weight, pw_bias, compute_dtype)
    w_full = jnp.transpose(wf, (1, 0, 2)).reshape(Cout, K * K * C)
    precision = (lax.Precision.HIGHEST
                 if jnp.dtype(compute_dtype) == jnp.dtype(jnp.float32)
                 else lax.Precision.DEFAULT)
    kernel = functools.partial(_asc_matmul_kernel, precision=precision)

    out = pl.pallas_call(
        kernel,
        out_shape=jax.ShapeDtypeStruct((N, Cout, sp), jnp.float32),
        grid_spec=pltpu.PrefetchScalarGridSpec(
            num_scalar_prefetch=0,
            grid=(N, sp // s_tile),
            in_specs=[
                pl.BlockSpec((None, K * K * C, s_tile), lambda n, b: (n, 0, b)),
                pl.BlockSpec((Cout, K * K * C), lambda n, b: (0, 0)),
                pl.BlockSpec((Cout, 1), lambda n, b: (0, 0)),
            ],
            out_specs=pl.BlockSpec((None, Cout, s_tile), lambda n, b: (n, 0, b)),
        ),
        compiler_params=pltpu.CompilerParams(
            dimension_semantics=("parallel", "parallel"),
            vmem_limit_bytes=_VMEM_LIMIT,
        ),
    )(xt, w_full, bf)
    return out[:, :, :S].reshape(N, Cout, Ho, Wo)


@functools.partial(jax.jit,
                   static_argnames=("stride", "padding", "dilation", "compute_dtype"))
def atrous_separable_conv(x, dw_weight, dw_bias, pw_weight, pw_bias, *,
                          stride=1, padding=0, dilation=1,
                          compute_dtype=jnp.bfloat16):
    """Forward pass of AtrousSeparableConvolution.

    x: (N, C, H, W); dw_weight: (C, 1, K, K); dw_bias: (C,);
    pw_weight: (Cout, C, 1, 1); pw_bias: (Cout,). Returns (N, Cout, Ho, Wo) f32.
    """
    if stride == 1:
        return _asc_stride1(x, dw_weight, dw_bias, pw_weight, pw_bias,
                            padding=padding, dilation=dilation,
                            compute_dtype=compute_dtype)
    return _asc_general(x, dw_weight, dw_bias, pw_weight, pw_bias,
                        stride=stride, padding=padding, dilation=dilation,
                        compute_dtype=compute_dtype)


# --------------------------------------------------------------------------
# Pure-JAX reference (matches PyTorch nn.Sequential(depthwise, pointwise))
# --------------------------------------------------------------------------
def _reference(x, dw_weight, dw_bias, pw_weight, pw_bias, *, stride, padding, dilation):
    dw = lax.conv_general_dilated(
        x, dw_weight, window_strides=(stride, stride),
        padding=((padding, padding), (padding, padding)),
        rhs_dilation=(dilation, dilation),
        dimension_numbers=("NCHW", "OIHW", "NCHW"),
        feature_group_count=x.shape[1],
        precision=lax.Precision.HIGHEST)
    dw = dw + dw_bias[None, :, None, None]
    pw = lax.conv_general_dilated(
        dw, pw_weight, window_strides=(1, 1), padding="VALID",
        dimension_numbers=("NCHW", "OIHW", "NCHW"),
        precision=lax.Precision.HIGHEST)
    return pw + pw_bias[None, :, None, None]


if __name__ == "__main__":
    # Module config: in_channels=4, out_channels=8, kernel_size=3,
    # stride=1, padding=2, dilation=2, bias=True -> output spatial == input.
    N, Cin, Cout, H, W = 2, 4, 8, 16, 16
    K, stride, padding, dilation = 3, 1, 2, 2

    key = jax.random.PRNGKey(0)
    kx, k1, k2, k3, k4 = jax.random.split(key, 5)
    x = jax.random.normal(kx, (N, Cin, H, W), dtype=jnp.float32)
    dw_weight = jax.random.normal(k1, (Cin, 1, K, K), dtype=jnp.float32) * 0.1
    dw_bias = jax.random.normal(k2, (Cin,), dtype=jnp.float32) * 0.1
    pw_weight = jax.random.normal(k3, (Cout, Cin, 1, 1), dtype=jnp.float32) * 0.1
    pw_bias = jax.random.normal(k4, (Cout,), dtype=jnp.float32) * 0.1

    # --- fast path (stride==1), bf16 streaming / f32 accumulation ---
    out = atrous_separable_conv(x, dw_weight, dw_bias, pw_weight, pw_bias,
                                stride=stride, padding=padding, dilation=dilation)
    out = jax.block_until_ready(out)
    ref = _reference(x, dw_weight, dw_bias, pw_weight, pw_bias,
                     stride=stride, padding=padding, dilation=dilation)
    assert out.shape == (N, Cout, H, W), out.shape
    err = float(jnp.max(jnp.abs(out - ref)))
    assert jnp.allclose(out, ref, atol=3e-2, rtol=3e-2), f"bf16 fast path err={err}"

    # --- fallback path (stride>1), f32 compute, tight tolerance ---
    x2 = jax.random.normal(jax.random.PRNGKey(1), (1, Cin, 9, 9), dtype=jnp.float32)
    out2 = atrous_separable_conv(x2, dw_weight, dw_bias, pw_weight, pw_bias,
                                 stride=2, padding=1, dilation=1,
                                 compute_dtype=jnp.float32)
    out2 = jax.block_until_ready(out2)
    ref2 = _reference(x2, dw_weight, dw_bias, pw_weight, pw_bias,
                      stride=2, padding=1, dilation=1)
    assert out2.shape == ref2.shape, (out2.shape, ref2.shape)
    err2 = float(jnp.max(jnp.abs(out2 - ref2)))
    assert jnp.allclose(out2, ref2, atol=1e-4, rtol=1e-4), f"f32 fallback err={err2}"

    print("KERNEL_OK")
</pallas_src>

<mosaic_0001>
module attributes {stable_mosaic.version = 11 : i64} {
  func.func @_asc_shift_kernel(%arg0: i32, %arg1: i32, %arg2: memref<1x4x384xbf16, #tpu.memory_space<vmem>>, %arg3: memref<1x4x128xbf16, #tpu.memory_space<vmem>>, %arg4: memref<9x8x4xbf16, #tpu.memory_space<vmem>>, %arg5: memref<8x1xf32, #tpu.memory_space<vmem>>, %arg6: memref<1x8x384xf32, #tpu.memory_space<vmem>>, %arg7: memref<4x512xbf16, #tpu.memory_space<vmem>>) attributes {dimension_semantics = [#tpu.dimension_semantics<parallel>, #tpu.dimension_semantics<parallel>], iteration_bounds = array<i64: 2, 1>, scalar_prefetch = 0 : i64, scratch_operands = 1 : i64, tpu.core_type = #tpu.core_type<tc>, window_params = [{transform_indices = @transform_0, window_bounds = array<i64: 1, 4, 384>}, {transform_indices = @transform_1, window_bounds = array<i64: 1, 4, 128>}, {pipeline_mode = #tpu.pipeline_mode<synchronous>, transform_indices = @transform_2, window_bounds = array<i64: 9, 8, 4>}, {pipeline_mode = #tpu.pipeline_mode<synchronous>, transform_indices = @transform_3, window_bounds = array<i64: 8, 1>}, {transform_indices = @transform_4, window_bounds = array<i64: 1, 8, 384>}]} {
    %c0 = arith.constant 0 : index
    %c0_0 = arith.constant 0 : index
    %c0_1 = arith.constant 0 : index
    %0 = vector.load %arg2[%c0, %c0_0, %c0_1] : memref<1x4x384xbf16, #tpu.memory_space<vmem>>, vector<1x4x384xbf16>
    %1 = vector.shape_cast %0 : vector<1x4x384xbf16> to vector<4x384xbf16>
    %c0_2 = arith.constant 0 : index
    %c0_3 = arith.constant 0 : index
    %2 = vector.load %arg7[%c0_2, %c0_3] : memref<4x512xbf16, #tpu.memory_space<vmem>>, vector<4x384xbf16>
    tpu.vector_store %arg7[%c0_2, %c0_3], %1 {strides = array<i32>} : memref<4x512xbf16, #tpu.memory_space<vmem>>, vector<4x384xbf16>,
    %c0_4 = arith.constant 0 : index
    %c0_5 = arith.constant 0 : index
    %c0_6 = arith.constant 0 : index
    %3 = vector.load %arg3[%c0_4, %c0_5, %c0_6] : memref<1x4x128xbf16, #tpu.memory_space<vmem>>, vector<1x4x128xbf16>
    %4 = vector.shape_cast %3 : vector<1x4x128xbf16> to vector<4x128xbf16>
    %c0_7 = arith.constant 0 : index
    %c384 = arith.constant 384 : index
    %5 = vector.load %arg7[%c0_7, %c384] : memref<4x512xbf16, #tpu.memory_space<vmem>>, vector<4x128xbf16>
    tpu.vector_store %arg7[%c0_7, %c384], %4 {strides = array<i32>} : memref<4x512xbf16, #tpu.memory_space<vmem>>, vector<4x128xbf16>,
    %c0_8 = arith.constant 0 : index
    %c0_9 = arith.constant 0 : index
    %6 = vector.load %arg7[%c0_8, %c0_9] : memref<4x512xbf16, #tpu.memory_space<vmem>>, vector<4x384xbf16>
    %c0_10 = arith.constant 0 : index
    %c0_11 = arith.constant 0 : index
    %c0_12 = arith.constant 0 : index
    %7 = vector.load %arg4[%c0_10, %c0_11, %c0_12] : memref<9x8x4xbf16, #tpu.memory_space<vmem>>, vector<1x8x4xbf16>
    %8 = vector.shape_cast %7 : vector<1x8x4xbf16> to vector<8x4xbf16>
    %cst = arith.constant dense<0.000000e+00> : vector<8x384xf32>
    %9 = tpu.matmul %8, %6, %cst {dimension_numbers = #tpu.dot_dimension_numbers<[1], [0], [0], [1], [0, 0, 1, 1], [], []>} : vector<8x4xbf16>, vector<4x384xbf16>, vector<8x384xf32> -> vector<8x384xf32>
    %c0_13 = arith.constant 0 : index
    %c2 = arith.constant 2 : index
    %10 = vector.load %arg7[%c0_13, %c2] : memref<4x512xbf16, #tpu.memory_space<vmem>>, vector<4x384xbf16>
    %c1 = arith.constant 1 : index
    %c0_14 = arith.constant 0 : index
    %c0_15 = arith.constant 0 : index
    %11 = vector.load %arg4[%c1, %c0_14, %c0_15] : memref<9x8x4xbf16, #tpu.memory_space<vmem>>, vector<1x8x4xbf16>
    %12 = vector.shape_cast %11 : vector<1x8x4xbf16> to vector<8x4xbf16>
    %cst_16 = arith.constant dense<0.000000e+00> : vector<8x384xf32>
    %13 = tpu.matmul %12, %10, %cst_16 {dimension_numbers = #tpu.dot_dimension_numbers<[1], [0], [0], [1], [0, 0, 1, 1], [], []>} : vector<8x4xbf16>, vector<4x384xbf16>, vector<8x384xf32> -> vector<8x384xf32>
    %14 = arith.addf %9, %13 : vector<8x384xf32>
    %c0_17 = arith.constant 0 : index
    %c4 = arith.constant 4 : index
    %15 = vector.load %arg7[%c0_17, %c4] : memref<4x512xbf16, #tpu.memory_space<vmem>>, vector<4x384xbf16>
    %c2_18 = arith.constant 2 : index
    %c0_19 = arith.constant 0 : index
    %c0_20 = arith.constant 0 : index
    %16 = vector.load %arg4[%c2_18, %c0_19, %c0_20] : memref<9x8x4xbf16, #tpu.memory_space<vmem>>, vector<1x8x4xbf16>
    %17 = vector.shape_cast %16 : vector<1x8x4xbf16> to vector<8x4xbf16>
    %cst_21 = arith.constant dense<0.000000e+00> : vector<8x384xf32>
    %18 = tpu.matmul %17, %15, %cst_21 {dimension_numbers = #tpu.dot_dimension_numbers<[1], [0], [0], [1], [0, 0, 1, 1], [], []>} : vector<8x4xbf16>, vector<4x384xbf16>, vector<8x384xf32> -> vector<8x384xf32>
    %19 = arith.addf %14, %18 : vector<8x384xf32>
    %c0_22 = arith.constant 0 : index
    %c40 = arith.constant 40 : index
    %20 = vector.load %arg7[%c0_22, %c40] : memref<4x512xbf16, #tpu.memory_space<vmem>>, vector<4x384xbf16>
    %c3 = arith.constant 3 : index
    %c0_23 = arith.constant 0 : index
    %c0_24 = arith.constant 0 : index
    %21 = vector.load %arg4[%c3, %c0_23, %c0_24] : memref<9x8x4xbf16, #tpu.memory_space<vmem>>, vector<1x8x4xbf16>
    %22 = vector.shape_cast %21 : vector<1x8x4xbf16> to vector<8x4xbf16>
    %cst_25 = arith.constant dense<0.000000e+00> : vector<8x384xf32>
    %23 = tpu.matmul %22, %20, %cst_25 {dimension_numbers = #tpu.dot_dimension_numbers<[1], [0], [0], [1], [0, 0, 1, 1], [], []>} : vector<8x4xbf16>, vector<4x384xbf16>, vector<8x384xf32> -> vector<8x384xf32>
    %24 = arith.addf %19, %23 : vector<8x384xf32>
    %c0_26 = arith.constant 0 : index
    %c42 = arith.constant 42 : index
    %25 = vector.load %arg7[%c0_26, %c42] : memref<4x512xbf16, #tpu.memory_space<vmem>>, vector<4x384xbf16>
    %c4_27 = arith.constant 4 : index
    %c0_28 = arith.constant 0 : index
    %c0_29 = arith.constant 0 : index
    %26 = vector.load %arg4[%c4_27, %c0_28, %c0_29] : memref<9x8x4xbf16, #tpu.memory_space<vmem>>, vector<1x8x4xbf16>
    %27 = vector.shape_cast %26 : vector<1x8x4xbf16> to vector<8x4xbf16>
    %cst_30 = arith.constant dense<0.000000e+00> : vector<8x384xf32>
    %28 = tpu.matmul %27, %25, %cst_30 {dimension_numbers = #tpu.dot_dimension_numbers<[1], [0], [0], [1], [0, 0, 1, 1], [], []>} : vector<8x4xbf16>, vector<4x384xbf16>, vector<8x384xf32> -> vector<8x384xf32>
    %29 = arith.addf %24, %28 : vector<8x384xf32>
    %c0_31 = arith.constant 0 : index
    %c44 = arith.constant 44 : index
    %30 = vector.load %arg7[%c0_31, %c44] : memref<4x512xbf16, #tpu.memory_space<vmem>>, vector<4x384xbf16>
    %c5 = arith.constant 5 : index
    %c0_32 = arith.constant 0 : index
    %c0_33 = arith.constant 0 : index
    %31 = vector.load %arg4[%c5, %c0_32, %c0_33] : memref<9x8x4xbf16, #tpu.memory_space<vmem>>, vector<1x8x4xbf16>
    %32 = vector.shape_cast %31 : vector<1x8x4xbf16> to vector<8x4xbf16>
    %cst_34 = arith.constant dense<0.000000e+00> : vector<8x384xf32>
    %33 = tpu.matmul %32, %30, %cst_34 {dimension_numbers = #tpu.dot_dimension_numbers<[1], [0], [0], [1], [0, 0, 1, 1], [], []>} : vector<8x4xbf16>, vector<4x384xbf16>, vector<8x384xf32> -> vector<8x384xf32>
    %34 = arith.addf %29, %33 : vector<8x384xf32>
    %c0_35 = arith.constant 0 : index
    %c80 = arith.constant 80 : index
    %35 = vector.load %arg7[%c0_35, %c80] : memref<4x512xbf16, #tpu.memory_space<vmem>>, vector<4x384xbf16>
    %c6 = arith.constant 6 : index
    %c0_36 = arith.constant 0 : index
    %c0_37 = arith.constant 0 : index
    %36 = vector.load %arg4[%c6, %c0_36, %c0_37] : memref<9x8x4xbf16, #tpu.memory_space<vmem>>, vector<1x8x4xbf16>
    %37 = vector.shape_cast %36 : vector<1x8x4xbf16> to vector<8x4xbf16>
    %cst_38 = arith.constant dense<0.000000e+00> : vector<8x384xf32>
    %38 = tpu.matmul %37, %35, %cst_38 {dimension_numbers = #tpu.dot_dimension_numbers<[1], [0], [0], [1], [0, 0, 1, 1], [], []>} : vector<8x4xbf16>, vector<4x384xbf16>, vector<8x384xf32> -> vector<8x384xf32>
    %39 = arith.addf %34, %38 : vector<8x384xf32>
    %c0_39 = arith.constant 0 : index
    %c82 = arith.constant 82 : index
    %40 = vector.load %arg7[%c0_39, %c82] : memref<4x512xbf16, #tpu.memory_space<vmem>>, vector<4x384xbf16>
    %c7 = arith.constant 7 : index
    %c0_40 = arith.constant 0 : index
    %c0_41 = arith.constant 0 : index
    %41 = vector.load %arg4[%c7, %c0_40, %c0_41] : memref<9x8x4xbf16, #tpu.memory_space<vmem>>, vector<1x8x4xbf16>
    %42 = vector.shape_cast %41 : vector<1x8x4xbf16> to vector<8x4xbf16>
    %cst_42 = arith.constant dense<0.000000e+00> : vector<8x384xf32>
    %43 = tpu.matmul %42, %40, %cst_42 {dimension_numbers = #tpu.dot_dimension_numbers<[1], [0], [0], [1], [0, 0, 1, 1], [], []>} : vector<8x4xbf16>, vector<4x384xbf16>, vector<8x384xf32> -> vector<8x384xf32>
    %44 = arith.addf %39, %43 : vector<8x384xf32>
    %c0_43 = arith.constant 0 : index
    %c84 = arith.constant 84 : index
    %45 = vector.load %arg7[%c0_43, %c84] : memref<4x512xbf16, #tpu.memory_space<vmem>>, vector<4x384xbf16>
    %c8 = arith.constant 8 : index
    %c0_44 = arith.constant 0 : index
    %c0_45 = arith.constant 0 : index
    %46 = vector.load %arg4[%c8, %c0_44, %c0_45] : memref<9x8x4xbf16, #tpu.memory_space<vmem>>, vector<1x8x4xbf16>
    %47 = vector.shape_cast %46 : vector<1x8x4xbf16> to vector<8x4xbf16>
    %cst_46 = arith.constant dense<0.000000e+00> : vector<8x384xf32>
    %48 = tpu.matmul %47, %45, %cst_46 {dimension_numbers = #tpu.dot_dimension_numbers<[1], [0], [0], [1], [0, 0, 1, 1], [], []>} : vector<8x4xbf16>, vector<4x384xbf16>, vector<8x384xf32> -> vector<8x384xf32>
    %49 = arith.addf %44, %48 : vector<8x384xf32>
    %c0_47 = arith.constant 0 : index
    %c0_48 = arith.constant 0 : index
    %50 = vector.load %arg5[%c0_47, %c0_48] : memref<8x1xf32, #tpu.memory_space<vmem>>, vector<8x1xf32>
    %51 = vector.broadcast %50 : vector<8x1xf32> to vector<8x384xf32>
    %52 = arith.addf %49, %51 : vector<8x384xf32>
    %c0_49 = arith.constant 0 : index
    %c0_50 = arith.constant 0 : index
    %c0_51 = arith.constant 0 : index
    %53 = vector.load %arg6[%c0_49, %c0_50, %c0_51] : memref<1x8x384xf32, #tpu.memory_space<vmem>>, vector<1x8x384xf32>
    %54 = vector.shape_cast %53 : vector<1x8x384xf32> to vector<8x384xf32>
    %55 = vector.shape_cast %52 : vector<8x384xf32> to vector<1x8x384xf32>
    tpu.vector_store %arg6[%c0_49, %c0_50, %c0_51], %55 {strides = array<i32>} : memref<1x8x384xf32, #tpu.memory_space<vmem>>, vector<1x8x384xf32>,
    return
  }
  func.func @transform_0(%arg0: i32, %arg1: i32) -> (i32, i32, i32) {
    %c0_i32 = arith.constant 0 : i32
    %c0_i32_0 = arith.constant 0 : i32
    return %arg0, %c0_i32, %arg1 : i32, i32, i32
  }
  func.func @transform_1(%arg0: i32, %arg1: i32) -> (i32, i32, i32) {
    %c1_i32 = arith.constant 1 : i32
    %0 = arith.addi %arg1, %c1_i32 : i32
    %c3_i32 = arith.constant 3 : i32
    %1 = arith.muli %0, %c3_i32 : i32
    %c5_i32 = arith.constant 5 : i32
    %2 = arith.minsi %1, %c5_i32 : i32
    %c0_i32 = arith.constant 0 : i32
    %c0_i32_0 = arith.constant 0 : i32
    return %arg0, %c0_i32, %2 : i32, i32, i32
  }
  func.func @transform_2(%arg0: i32, %arg1: i32) -> (i32, i32, i32) {
    %c0_i32 = arith.constant 0 : i32
    %c0_i32_0 = arith.constant 0 : i32
    %c0_i32_1 = arith.constant 0 : i32
    %c0_i32_2 = arith.constant 0 : i32
    return %c0_i32, %c0_i32_0, %c0_i32_1 : i32, i32, i32
  }
  func.func @transform_3(%arg0: i32, %arg1: i32) -> (i32, i32) {
    %c0_i32 = arith.constant 0 : i32
    %c0_i32_0 = arith.constant 0 : i32
    %c0_i32_1 = arith.constant 0 : i32
    return %c0_i32, %c0_i32_0 : i32, i32
  }
  func.func @transform_4(%arg0: i32, %arg1: i32) -> (i32, i32, i32) {
    %c0_i32 = arith.constant 0 : i32
    %c0_i32_0 = arith.constant 0 : i32
    return %arg0, %c0_i32, %arg1 : i32, i32, i32
  }
}

</mosaic_0001>

<llo_original>
// kernel: atrous_separable_conv.1
$region0: #{atrous_separable_conv.1}
  #allocation0 [shape = 'u32[]', space=smem, size = 0x4, offset = 0x4, fixed_abs, tag = 'smem constant byte address 0x4 - core index']
  #allocation1 [shape = 'u32[72,128]{1,0:T(1,128)}', space=vmem, size = 0x9000, scoped, tag = 'internal scratch']
  #allocation2 [shape = 'bf16[4,512]{1,0:T(4,128)(2,1)}', space=vmem, size = 0x1000, scoped, tag = 'scratch operand']
  %s0 = inlined_call_operand.vmem [shape: bf16[2,4,768], index: 0, kind: input, shape index: {}, may-alias: {0,1}]
  %s1 = inlined_call_operand.vmem [shape: bf16[2,4,768], index: 1, kind: input, shape index: {}, may-alias: {0,1}]
  %s2 = inlined_call_operand.vmem [shape: bf16[9,8,4], index: 2, kind: input, shape index: {}]
  %s3 = inlined_call_operand.vmem [shape: f32[8,1], index: 3, kind: input, shape index: {}]
  %s4 = inlined_call_operand.vmem [shape: f32[2,8,384], index: 4, kind: output, shape index: {}]
  %s5 = sld [smem:[#allocation0]]
  $region49: #{atrous_separable_conv.1} parent=0
    _
  %s7 = ssub.s32 1, %s5
  %s8 = scalar_select 0, %s7, %s5
  loop: start=0, step=1, limit=4
  $region2: #{atrous_separable_conv.1} parent=0 // loop_pre_header
    _
  $region3: #{atrous_separable_conv.1} parent=0 // loop_header
    %s10 = sphi 0, %s14
    %p11 = scmp.ge.s32.totalorder %s10, 4
    %s17 = sphi 0, %s29
    %s18 = sphi 0, %s25
    %s19 = sphi 0, %s17
    %s20 = sphi 0, %s18
    %s21 = sphi 0, %s19
    %s22 = sphi 0, %s20
    %s34 = sphi 0, %s36
    %s37 = sphi 0, %s34
    %s38 = sphi 0, %s37
    %s54 = sphi 0, %s38
    %s70 = sphi 0, %s72
    %s73 = sphi 0, %s70
    %s74 = sphi 0, %s73
    %s90 = sphi 0, %s74
    %s94 = sphi 0, %s94
    %s96 = sphi 0, %s94
    %s97 = sphi 0, %s96
    %s111 = sphi 0, %s97
    %s115 = sphi 0, %s115
    %s117 = sphi 0, %s115
    %s118 = sphi 0, %s117
    %s132 = sphi 0, %s118
    %s140 = sphi 0, %s142
    %s143 = sphi 0, %s140
    %s144 = sphi 0, %s143
    %s160 = sphi 0, %s144
  $region4: #{atrous_separable_conv.1} parent=0 // loop_header_branch
    %13 = sbr.rel (%p11) target = $region8
  $region5: #{atrous_separable_conv.1} parent=0 // loop_body
    %s15 = ssub.s32 %s10, 1
    %s16 = ssub.s32 %s10, 2
    %s23 = sadd.s32 1, %s18
    %p24 = scmp.ge.s32.totalorder %s23, 1
    %s25 = scalar_select %p24, 0, %s23
    %s26 = sadd.s32 1, %s17
    %s27 = scalar_select %p24, %s26, %s17
    %p28 = scmp.ge.s32.totalorder %s27, 2
    %s29 = scalar_select %p28, 0, %s27
    %s30 = ssub.s32 %s17, %s29
    %s31 = ssub.s32 %s18, %s25
    %s32 = sor.u32 %s30, %s31
    %p33 = scmp.eq.s32.totalorder %s32, 0
    %s35 = sadd.s32 %s34, 1
    %s36 = scalar_select %p33, %s34, %s35
    %p39 = pneg %p33
    %p40 = scmp.eq.s32.totalorder %s10, 1
    %p41 = por %p39, %p40
    %p42 = scmp.ne.s32.totalorder %s34, %s37
    %p43 = scmp.eq.s32.totalorder %s10, 0
    %p44 = por %p42, %p43
    %p45 = scmp.ne.s32.totalorder %s34, %s37
    %p46 = scmp.eq.s32.totalorder %s15, 1
    %p47 = por %p45, %p46
    %p48 = scmp.ne.s32.totalorder %s37, %s38
    %p49 = scmp.eq.s32.totalorder %s15, 0
    %p50 = por %p48, %p49
    %p51 = scmp.ne.s32.totalorder %s37, %s38
    %p52 = scmp.eq.s32.totalorder %s16, 1
    %p53 = por %p51, %p52
    %p55 = scmp.ne.s32.totalorder %s38, %s54
    %p56 = scmp.eq.s32.totalorder %s16, 0
    %p57 = por %p55, %p56
    %s58 = sadd.s32 %s18, 1
    %s59 = smul.u32 %s58, 3
    %p60 = scmp.lt.s32.totalorder %s59, 5
    %s61 = scalar_select %p60, %s59, 5
    %s62 = sadd.s32 %s25, 1
    %s63 = smul.u32 %s62, 3
    %p64 = scmp.lt.s32.totalorder %s63, 5
    %s65 = scalar_select %p64, %s63, 5
    %s66 = ssub.s32 %s17, %s29
    %s67 = ssub.s32 %s61, %s65
    %s68 = sor.u32 %s66, %s67
    %p69 = scmp.eq.s32.totalorder %s68, 0
    %s71 = sadd.s32 %s70, 1
    %s72 = scalar_select %p69, %s70, %s71
    %p75 = pneg %p69
    %p76 = scmp.eq.s32.totalorder %s10, 1
    %p77 = por %p75, %p76
    %p78 = scmp.ne.s32.totalorder %s70, %s73
    %p79 = scmp.eq.s32.totalorder %s10, 0
    %p80 = por %p78, %p79
    %p81 = scmp.ne.s32.totalorder %s70, %s73
    %p82 = scmp.eq.s32.totalorder %s15, 1
    %p83 = por %p81, %p82
    %p84 = scmp.ne.s32.totalorder %s73, %s74
    %p85 = scmp.eq.s32.totalorder %s15, 0
    %p86 = por %p84, %p85
    %p87 = scmp.ne.s32.totalorder %s73, %s74
    %p88 = scmp.eq.s32.totalorder %s16, 1
    %p89 = por %p87, %p88
    %p91 = scmp.ne.s32.totalorder %s74, %s90
    %p92 = scmp.eq.s32.totalorder %s16, 0
    %p93 = por %p91, %p92
    %s95 = sadd.s32 %s94, 1
    %p98 = scmp.eq.s32.totalorder %s10, 1
    %p99 = scmp.ne.s32.totalorder %s94, %s96
    %p100 = scmp.eq.s32.totalorder %s10, 0
    %p101 = por %p99, %p100
    %p102 = scmp.ne.s32.totalorder %s94, %s96
    %p103 = scmp.eq.s32.totalorder %s15, 1
    %p104 = por %p102, %p103
    %p105 = scmp.ne.s32.totalorder %s96, %s97
    %p106 = scmp.eq.s32.totalorder %s15, 0
    %p107 = por %p105, %p106
    %p108 = scmp.ne.s32.totalorder %s96, %s97
    %p109 = scmp.eq.s32.totalorder %s16, 1
    %p110 = por %p108, %p109
    %p112 = scmp.ne.s32.totalorder %s97, %s111
    %p113 = scmp.eq.s32.totalorder %s16, 0
    %p114 = por %p112, %p113
    %s116 = sadd.s32 %s115, 1
    %p119 = scmp.eq.s32.totalorder %s10, 1
    %p120 = scmp.ne.s32.totalorder %s115, %s117
    %p121 = scmp.eq.s32.totalorder %s10, 0
    %p122 = por %p120, %p121
    %p123 = scmp.ne.s32.totalorder %s115, %s117
    %p124 = scmp.eq.s32.totalorder %s15, 1
    %p125 = por %p123, %p124
    %p126 = scmp.ne.s32.totalorder %s117, %s118
    %p127 = scmp.eq.s32.totalorder %s15, 0
    %p128 = por %p126, %p127
    %p129 = scmp.ne.s32.totalorder %s117, %s118
    %p130 = scmp.eq.s32.totalorder %s16, 1
    %p131 = por %p129, %p130
    %p133 = scmp.ne.s32.totalorder %s118, %s132
    %p134 = scmp.eq.s32.totalorder %s16, 0
    %p135 = por %p133, %p134
    %s136 = ssub.s32 %s17, %s29
    %s137 = ssub.s32 %s18, %s25
    %s138 = sor.u32 %s136, %s137
    %p139 = scmp.eq.s32.totalorder %s138, 0
    %s141 = sadd.s32 %s140, 1
    %s142 = scalar_select %p139, %s140, %s141
    %p145 = pneg %p139
    %p146 = scmp.eq.s32.totalorder %s10, 1
    %p147 = por %p145, %p146
    %p148 = scmp.ne.s32.totalorder %s140, %s143
    %p149 = scmp.eq.s32.totalorder %s10, 0
    %p150 = por %p148, %p149
    %p151 = scmp.ne.s32.totalorder %s140, %s143
    %p152 = scmp.eq.s32.totalorder %s15, 1
    %p153 = por %p151, %p152
    %p154 = scmp.ne.s32.totalorder %s143, %s144
    %p155 = scmp.eq.s32.totalorder %s15, 0
    %p156 = por %p154, %p155
    %p157 = scmp.ne.s32.totalorder %s143, %s144
    %p158 = scmp.eq.s32.totalorder %s16, 1
    %p159 = por %p157, %p158
    %p161 = scmp.ne.s32.totalorder %s144, %s160
    %p162 = scmp.eq.s32.totalorder %s16, 0
    %p163 = por %p161, %p162
    %p164 = scmp.le.s32.totalorder 1, %s10
    %p165 = scmp.lt.s32.totalorder %s10, 3
    %p166 = pnand %p164, %p165
    %p167 = pneg %p166
    // Predicated region
    $region9: #{atrous_separable_conv.1} parent=5 // pred_check
      _
    $region10: #{atrous_separable_conv.1} parent=5 // pred_check_branch
      %169 = sbr.rel (%p166) target = $region12
    $region11: #{atrous_separable_conv.1} parent=5 // pred_region
      %s170 = ssub.s32 %s10, 1
      // Predicated region
      $region13: #{atrous_separable_conv.1} parent=11 // pred_check
        %p171 = pneg %p107
      $region14: #{atrous_separable_conv.1} parent=11 // pred_check_branch
        %173 = sbr.rel (%p171) target = $region16
      $region15: #{atrous_separable_conv.1} parent=11 // pred_region
        _
      $region16: #{atrous_separable_conv.1} parent=11 // pred_fallthru
        _
      // Predicated region
      $region17: #{atrous_separable_conv.1} parent=11 // pred_check
        %p174 = pneg %p128
      $region18: #{atrous_separable_conv.1} parent=11 // pred_check_branch
        %176 = sbr.rel (%p174) target = $region20
      $region19: #{atrous_separable_conv.1} parent=11 // pred_region
        _
      $region20: #{atrous_separable_conv.1} parent=11 // pred_fallthru
        _
    $region12: #{atrous_separable_conv.1} parent=5 // pred_fallthru
      _
    %p177 = scmp.lt.s32.totalorder %s10, 2
    // Predicated region
    $region21: #{atrous_separable_conv.1} parent=5 // pred_check
      %p178 = pneg %p177
    $region22: #{atrous_separable_conv.1} parent=5 // pred_check_branch
      %180 = sbr.rel (%p178) target = $region24
    $region23: #{atrous_separable_conv.1} parent=5 // pred_region
      // Predicated region
      $region25: #{atrous_separable_conv.1} parent=23 // pred_check
        %p181 = pneg %p44
      $region26: #{atrous_separable_conv.1} parent=23 // pred_check_branch
        %183 = sbr.rel (%p181) target = $region28
      $region27: #{atrous_separable_conv.1} parent=23 // pred_region
        %s184 = smul.u32 3, %s18
        %p185 = scmp.lt.s32.totalorder %s17, 1
        %s186 = scalar_select %p185, %s17, 1
        %p187 = scmp.lt.s32.totalorder %s184, 5
        %s188 = scalar_select %p187, %s184, 5
        %s189 = smul.addr %s186, 6
        %s190 = sadd.s32 %s188, %s189
        %s191 = smul.addr %s190, 2
        %s192 = scalar_lea.vmem %s0, %s191
        %s193 = smul.u32 3, %s18
      $region28: #{atrous_separable_conv.1} parent=23 // pred_fallthru
        _
      // Predicated region
      $region29: #{atrous_separable_conv.1} parent=23 // pred_check
        %p194 = pneg %p80
      $region30: #{atrous_separable_conv.1} parent=23 // pred_check_branch
        %196 = sbr.rel (%p194) target = $region32
      $region31: #{atrous_separable_conv.1} parent=23 // pred_region
        %s197 = sadd.s32 %s18, 1
        %s198 = smul.u32 %s197, 3
        %p199 = scmp.lt.s32.totalorder %s198, 5
        %s200 = scalar_select %p199, %s198, 5
        %p201 = scmp.lt.s32.totalorder %s17, 1
        %s202 = scalar_select %p201, %s17, 1
        %p203 = scmp.lt.s32.totalorder %s200, 5
        %s204 = scalar_select %p203, %s200, 5
        %s205 = smul.addr %s202, 6
        %s206 = sadd.s32 %s204, %s205
        %s207 = smul.addr %s206, 2
        %s208 = scalar_lea.vmem %s1, %s207
        %s209 = sadd.s32 %s18, 1
        %s210 = smul.u32 %s209, 3
        %p211 = scmp.lt.s32.totalorder %s210, 5
        %s212 = scalar_select %p211, %s210, 5
      $region32: #{atrous_separable_conv.1} parent=23 // pred_fallthru
        _
    $region24: #{atrous_separable_conv.1} parent=5 // pred_fallthru
      _
    %p213 = scmp.le.s32.totalorder 1, %s10
    %p214 = scmp.lt.s32.totalorder %s10, 3
    %p215 = pnand %p213, %p214
    %p216 = pneg %p215
    // Predicated region
    $region33: #{atrous_separable_conv.1} parent=5 // pred_check
      _
    $region34: #{atrous_separable_conv.1} parent=5 // pred_check_branch
      %218 = sbr.rel (%p215) target = $region36
    $region35: #{atrous_separable_conv.1} parent=5 // pred_region
      %s219 = ssub.s32 %s10, 1
      %s220 = smul.u32 3, %s20
      %p221 = scmp.lt.s32.totalorder %s19, 1
      %s222 = scalar_select %p221, %s19, 1
      %p223 = scmp.lt.s32.totalorder %s220, 5
      %s224 = scalar_select %p223, %s220, 5
      %s225 = smul.addr %s222, 6
      %s226 = sadd.s32 %s224, %s225
      %s227 = smul.addr %s226, 2
      %s228 = scalar_lea.vmem %s0, %s227
      %p229 = pneg %p50
      %p230 = pneg %p47
      %s231 = sadd.s32 %s20, 1
      %s232 = smul.u32 %s231, 3
      %p233 = scmp.lt.s32.totalorder %s232, 5
      %s234 = scalar_select %p233, %s232, 5
      %p235 = scmp.lt.s32.totalorder %s19, 1
      %s236 = scalar_select %p235, %s19, 1
      %p237 = scmp.lt.s32.totalorder %s234, 5
      %s238 = scalar_select %p237, %s234, 5
      %s239 = smul.addr %s236, 6
      %s240 = sadd.s32 %s238, %s239
      %s241 = smul.addr %s240, 2
      %s242 = scalar_lea.vmem %s1, %s241
      %p243 = pneg %p86
      %p244 = pneg %p83
      %p245 = pneg %p107
      %p246 = pneg %p104
      %p247 = pneg %p128
      %p248 = pneg %p125
      %p249 = pneg %p156
      %p250 = pneg %p153
      %s251 = smul.u32 3, %s20
      %p252 = scmp.lt.s32.totalorder %s19, 1
      %s253 = scalar_select %p252, %s19, 1
      %p254 = scmp.lt.s32.totalorder %s251, 2
      %s255 = scalar_select %p254, %s251, 2
      %s256 = smul.addr %s253, 3
      %s257 = sadd.s32 %s255, %s256
      %s258 = smul.addr %s257, 8
      %s259 = scalar_lea.vmem %s4, %s258
      %s260 = smul.u32 3, %s20
      %p261 = scmp.lt.s32.totalorder %s19, 1
      %s262 = scalar_select %p261, %s19, 1
      %p263 = scmp.lt.s32.totalorder %s260, 5
      %s264 = scalar_select %p263, %s260, 5
      %s265 = smul.addr %s262, 6
      %s266 = sadd.s32 %s264, %s265
      %s267 = smul.addr %s266, 2
      %s268 = scalar_lea.vmem %s0, %s267
      %s269 = smul.u32 3, %s20
      %s270 = sadd.s32 %s20, 1
      %s271 = smul.u32 %s270, 3
      %p272 = scmp.lt.s32.totalorder %s271, 5
      %s273 = scalar_select %p272, %s271, 5
      %p274 = scmp.lt.s32.totalorder %s19, 1
      %s275 = scalar_select %p274, %s19, 1
      %p276 = scmp.lt.s32.totalorder %s273, 5
      %s277 = scalar_select %p276, %s273, 5
      %s278 = smul.addr %s275, 6
      %s279 = sadd.s32 %s277, %s278
      %s280 = smul.addr %s279, 2
      %s281 = scalar_lea.vmem %s1, %s280
      %s282 = sadd.s32 %s20, 1
      %s283 = smul.u32 %s282, 3
      %p284 = scmp.lt.s32.totalorder %s283, 5
      %s285 = scalar_select %p284, %s283, 5
      %s286 = smul.u32 3, %s20
      %p287 = scmp.lt.s32.totalorder %s19, 1
      %s288 = scalar_select %p287, %s19, 1
      %p289 = scmp.lt.s32.totalorder %s286, 2
      %s290 = scalar_select %p289, %s286, 2
      %s291 = smul.addr %s288, 3
      %s292 = sadd.s32 %s290, %s291
      %s293 = smul.addr %s292, 8
      %s294 = scalar_lea.vmem %s4, %s293
      %s295 = smul.u32 3, %s20
      %v297 = vld [vmem:[%s268] sm:$0x3f]
      %298 = vst [vmem:[#allocation2] sm:$0x3f] %v297
      %v299 = vld [vmem:[%s281] sm:$0x3]
      %300 = vst [vmem:[#allocation2 + $0x6] sm:$0x3] %v299
      %v301 = vld [vmem:[#allocation2] sm:$0x3f]
      %v302 = vld [vmem:[%s2] sm:$0xf]
      %v303 = vld [vmem:[#allocation2] sm:$0xff]
      %s304 = scalar_lea.vmem %s2, 4
      %v305 = vld [vmem:[%s304] sm:$0xf]
      %307 = vst [vmem:[#allocation1] ss:$4 sm:$0xff] %v303
      %v308 = vld.sshfl [vmem:[#allocation1] sm:$0xff pattern:$0x73625140]
      %v310 = vld.sshfl [vmem:[#allocation1 + $0x8] sm:$0xff pattern:$0x73625140]
      %v312 = vld.sshfl [vmem:[#allocation1 + $0x10] sm:$0xff pattern:$0x73625140]
      %v314 = vld.sshfl [vmem:[#allocation1 + $0x18] sm:$0xff pattern:$0x73625140]
      %316 = vrot.lane.b32.xlu0 %v308, 126
      %v317 = vpop.permute.xlu0 %316
      %318 = vrot.lane.b32.xlu0 %v310, 126
      %v319 = vpop.permute.xlu0 %318
      %320 = vrot.lane.b32.xlu0 %v312, 126
      %v321 = vpop.permute.xlu0 %320
      %322 = vrot.lane.b32.xlu0 %v314, 126
      %v323 = vpop.permute.xlu0 %322
      %vm324 = vcmask 1031168
      %v325 = vsel %vm324, %v317, %v319
      %v326 = vsel %vm324, %v319, %v321
      %v327 = vsel %vm324, %v321, %v323
      %vm328 = vcmask 31744
      %v330 = vsel %vm328, %v305, 0
      %vm332 = vcmask 1041408
      %v334 = vsel %vm332, %v325, 0
      %v337 = vsel %vm332, %v326, 0
      %v340 = vsel %vm332, %v327, 0
      %342 = vmatpush.bf16.msra.mxu0 0
      %343 = vmatpush.bf16.msra.mxu0 0
      %344 = vmatpush.bf16.msra.mxu0 0
      %345 = vmatpush.bf16.msra.mxu0 0
      %346 = vmatpush.bf16.msra.mxu0 0
      %347 = vmatpush.bf16.msra.mxu0 0
      %348 = vmatpush.bf16.msra.mxu0 0
      %349 = vmatpush.bf16.msra.mxu0 %v334
      %350 = vmatmul.bf16.gmra.mxu0 %v330
      %v351 = vpop.f32.mrf.mxu0
      %v352 = vadd.f32 0.0, %v351
      %v353 = vpop.f32.mrf.mxu0
      %354 = vdwg.mxu0
      %355 = vmatpush.bf16.msra.mxu0 0
      %356 = vmatpush.bf16.msra.mxu0 0
      %357 = vmatpush.bf16.msra.mxu0 0
      %358 = vmatpush.bf16.msra.mxu0 0
      %359 = vmatpush.bf16.msra.mxu0 0
      %360 = vmatpush.bf16.msra.mxu0 0
      %361 = vmatpush.bf16.msra.mxu0 0
      %362 = vmatpush.bf16.msra.mxu0 %v337
      %363 = vmatmul.bf16.gmra.mxu0 %v330
      %v364 = vpop.f32.mrf.mxu0
      %v365 = vadd.f32 0.0, %v364
      %v366 = vpop.f32.mrf.mxu0
      %367 = vdwg.mxu0
      %368 = vmatpush.bf16.msra.mxu0 0
      %369 = vmatpush.bf16.msra.mxu0 0
      %370 = vmatpush.bf16.msra.mxu0 0
      %371 = vmatpush.bf16.msra.mxu0 0
      %372 = vmatpush.bf16.msra.mxu0 0
      %373 = vmatpush.bf16.msra.mxu0 0
      %374 = vmatpush.bf16.msra.mxu0 0
      %375 = vmatpush.bf16.msra.mxu0 %v340
      %376 = vmatmul.bf16.gmra.mxu0 %v330
      %v377 = vpop.f32.mrf.mxu0
      %v378 = vadd.f32 0.0, %v377
      %v379 = vpop.f32.mrf.mxu0
      %380 = vdwg.mxu0
      %382 = vst [vmem:[#allocation1] ss:$4 sm:$0xff] %v301
      %v383 = vld.sshfl [vmem:[#allocation1] sm:$0xff pattern:$0x73625140]
      %v384 = vld.sshfl [vmem:[#allocation1 + $0x8] sm:$0xff pattern:$0x73625140]
      %v385 = vld.sshfl [vmem:[#allocation1 + $0x10] sm:$0xff pattern:$0x73625140]
      %v387 = vsel %vm328, %v302, 0
      %v389 = vsel %vm332, %v383, 0
      %v391 = vsel %vm332, %v384, 0
      %v393 = vsel %vm332, %v385, 0
      %395 = vmatpush.bf16.msra.mxu0 0
      %396 = vmatpush.bf16.msra.mxu0 0
      %397 = vmatpush.bf16.msra.mxu0 0
      %398 = vmatpush.bf16.msra.mxu0 0
      %399 = vmatpush.bf16.msra.mxu0 0
      %400 = vmatpush.bf16.msra.mxu0 0
      %401 = vmatpush.bf16.msra.mxu0 0
      %402 = vmatpush.bf16.msra.mxu0 %v389
      %403 = vmatmul.bf16.gmra.mxu0 %v387
      %v404 = vpop.f32.mrf.mxu0
      %v405 = vadd.f32 %v352, %v404
      %v406 = vpop.f32.mrf.mxu0
      %407 = vdwg.mxu0
      %408 = vmatpush.bf16.msra.mxu0 0
      %409 = vmatpush.bf16.msra.mxu0 0
      %410 = vmatpush.bf16.msra.mxu0 0
      %411 = vmatpush.bf16.msra.mxu0 0
      %412 = vmatpush.bf16.msra.mxu0 0
      %413 = vmatpush.bf16.msra.mxu0 0
      %414 = vmatpush.bf16.msra.mxu0 0
      %415 = vmatpush.bf16.msra.mxu0 %v391
      %416 = vmatmul.bf16.gmra.mxu0 %v387
      %v417 = vpop.f32.mrf.mxu0
      %v418 = vadd.f32 %v365, %v417
      %v419 = vpop.f32.mrf.mxu0
      %420 = vdwg.mxu0
      %421 = vmatpush.bf16.msra.mxu0 0
      %422 = vmatpush.bf16.msra.mxu0 0
      %423 = vmatpush.bf16.msra.mxu0 0
      %424 = vmatpush.bf16.msra.mxu0 0
      %425 = vmatpush.bf16.msra.mxu0 0
      %426 = vmatpush.bf16.msra.mxu0 0
      %427 = vmatpush.bf16.msra.mxu0 0
      %428 = vmatpush.bf16.msra.mxu0 %v393
      %429 = vmatmul.bf16.gmra.mxu0 %v387
      %v430 = vpop.f32.mrf.mxu0
      %v431 = vadd.f32 %v378, %v430
      %v432 = vpop.f32.mrf.mxu0
      %433 = vdwg.mxu0
      %v434 = vld [vmem:[#allocation2] sm:$0xff]
      %s435 = scalar_lea.vmem %s2, 8
      %v436 = vld [vmem:[%s435] sm:$0xf]
      %438 = vst [vmem:[#allocation1] ss:$4 sm:$0xff] %v434
      %v439 = vld.sshfl [vmem:[#allocation1] sm:$0xff pattern:$0x73625140]
      %v441 = vld.sshfl [vmem:[#allocation1 + $0x8] sm:$0xff pattern:$0x73625140]
      %v443 = vld.sshfl [vmem:[#allocation1 + $0x10] sm:$0xff pattern:$0x73625140]
      %v445 = vld.sshfl [vmem:[#allocation1 + $0x18] sm:$0xff pattern:$0x73625140]
      %447 = vrot.lane.b32.xlu0 %v439, 124
      %v448 = vpop.permute.xlu0 %447
      %449 = vrot.lane.b32.xlu0 %v441, 124
      %v450 = vpop.permute.xlu0 %449
      %451 = vrot.lane.b32.xlu0 %v443, 124
      %v452 = vpop.permute.xlu0 %451
      %453 = vrot.lane.b32.xlu0 %v445, 124
      %v454 = vpop.permute.xlu0 %453
      %vm455 = vcmask 1014784
      %v456 = vsel %vm455, %v448, %v450
      %v457 = vsel %vm455, %v450, %v452
      %v458 = vsel %vm455, %v452, %v454
      %v460 = vsel %vm328, %v436, 0
      %v463 = vsel %vm332, %v456, 0
      %v466 = vsel %vm332, %v457, 0
      %v469 = vsel %vm332, %v458, 0
      %471 = vmatpush.bf16.msra.mxu0 0
      %472 = vmatpush.bf16.msra.mxu0 0
      %473 = vmatpush.bf16.msra.mxu0 0
      %474 = vmatpush.bf16.msra.mxu0 0
      %475 = vmatpush.bf16.msra.mxu0 0
      %476 = vmatpush.bf16.msra.mxu0 0
      %477 = vmatpush.bf16.msra.mxu0 0
      %478 = vmatpush.bf16.msra.mxu0 %v463
      %479 = vmatmul.bf16.gmra.mxu0 %v460
      %v480 = vpop.f32.mrf.mxu0
      %v481 = vadd.f32 0.0, %v480
      %v482 = vpop.f32.mrf.mxu0
      %483 = vdwg.mxu0
      %484 = vmatpush.bf16.msra.mxu0 0
      %485 = vmatpush.bf16.msra.mxu0 0
      %486 = vmatpush.bf16.msra.mxu0 0
      %487 = vmatpush.bf16.msra.mxu0 0
      %488 = vmatpush.bf16.msra.mxu0 0
      %489 = vmatpush.bf16.msra.mxu0 0
      %490 = vmatpush.bf16.msra.mxu0 0
      %491 = vmatpush.bf16.msra.mxu0 %v466
      %492 = vmatmul.bf16.gmra.mxu0 %v460
      %v493 = vpop.f32.mrf.mxu0
      %v494 = vadd.f32 0.0, %v493
      %v495 = vpop.f32.mrf.mxu0
      %496 = vdwg.mxu0
      %497 = vmatpush.bf16.msra.mxu0 0
      %498 = vmatpush.bf16.msra.mxu0 0
      %499 = vmatpush.bf16.msra.mxu0 0
      %500 = vmatpush.bf16.msra.mxu0 0
      %501 = vmatpush.bf16.msra.mxu0 0
      %502 = vmatpush.bf16.msra.mxu0 0
      %503 = vmatpush.bf16.msra.mxu0 0
      %504 = vmatpush.bf16.msra.mxu0 %v469
      %505 = vmatmul.bf16.gmra.mxu0 %v460
      %v506 = vpop.f32.mrf.mxu0
      %v507 = vadd.f32 0.0, %v506
      %v508 = vpop.f32.mrf.mxu0
      %509 = vdwg.mxu0
      %v510 = vadd.f32 %v405, %v481
      %v511 = vadd.f32 %v418, %v494
      %v512 = vadd.f32 %v431, %v507
      %v513 = vld [vmem:[#allocation2] sm:$0xff]
      %s514 = scalar_lea.vmem %s2, 12
      %v515 = vld [vmem:[%s514] sm:$0xf]
      %517 = vst [vmem:[#allocation1] ss:$4 sm:$0xff] %v513
      %v518 = vld.sshfl [vmem:[#allocation1] sm:$0xff pattern:$0x73625140]
      %v520 = vld.sshfl [vmem:[#allocation1 + $0x8] sm:$0xff pattern:$0x73625140]
      %v522 = vld.sshfl [vmem:[#allocation1 + $0x10] sm:$0xff pattern:$0x73625140]
      %v524 = vld.sshfl [vmem:[#allocation1 + $0x18] sm:$0xff pattern:$0x73625140]
      %526 = vrot.lane.b32.xlu0 %v518, 88
      %v527 = vpop.permute.xlu0 %526
      %528 = vrot.lane.b32.xlu0 %v520, 88
      %v529 = vpop.permute.xlu0 %528
      %530 = vrot.lane.b32.xlu0 %v522, 88
      %v531 = vpop.permute.xlu0 %530
      %532 = vrot.lane.b32.xlu0 %v524, 88
      %v533 = vpop.permute.xlu0 %532
      %vm534 = vcmask 719872
      %v535 = vsel %vm534, %v527, %v529
      %v536 = vsel %vm534, %v529, %v531
      %v537 = vsel %vm534, %v531, %v533
      %v539 = vsel %vm328, %v515, 0
      %v542 = vsel %vm332, %v535, 0
      %v545 = vsel %vm332, %v536, 0
      %v548 = vsel %vm332, %v537, 0
      %550 = vmatpush.bf16.msra.mxu0 0
      %551 = vmatpush.bf16.msra.mxu0 0
      %552 = vmatpush.bf16.msra.mxu0 0
      %553 = vmatpush.bf16.msra.mxu0 0
      %554 = vmatpush.bf16.msra.mxu0 0
      %555 = vmatpush.bf16.msra.mxu0 0
      %556 = vmatpush.bf16.msra.mxu0 0
      %557 = vmatpush.bf16.msra.mxu0 %v542
      %558 = vmatmul.bf16.gmra.mxu0 %v539
      %v559 = vpop.f32.mrf.mxu0
      %v560 = vadd.f32 0.0, %v559
      %v561 = vpop.f32.mrf.mxu0
      %562 = vdwg.mxu0
      %563 = vmatpush.bf16.msra.mxu0 0
      %564 = vmatpush.bf16.msra.mxu0 0
      %565 = vmatpush.bf16.msra.mxu0 0
      %566 = vmatpush.bf16.msra.mxu0 0
      %567 = vmatpush.bf16.msra.mxu0 0
      %568 = vmatpush.bf16.msra.mxu0 0
      %569 = vmatpush.bf16.msra.mxu0 0
      %570 = vmatpush.bf16.msra.mxu0 %v545
      %571 = vmatmul.bf16.gmra.mxu0 %v539
      %v572 = vpop.f32.mrf.mxu0
      %v573 = vadd.f32 0.0, %v572
      %v574 = vpop.f32.mrf.mxu0
      %575 = vdwg.mxu0
      %576 = vmatpush.bf16.msra.mxu0 0
      %577 = vmatpush.bf16.msra.mxu0 0
      %578 = vmatpush.bf16.msra.mxu0 0
      %579 = vmatpush.bf16.msra.mxu0 0
      %580 = vmatpush.bf16.msra.mxu0 0
      %581 = vmatpush.bf16.msra.mxu0 0
      %582 = vmatpush.bf16.msra.mxu0 0
      %583 = vmatpush.bf16.msra.mxu0 %v548
      %584 = vmatmul.bf16.gmra.mxu0 %v539
      %v585 = vpop.f32.mrf.mxu0
      %v586 = vadd.f32 0.0, %v585
      %v587 = vpop.f32.mrf.mxu0
      %588 = vdwg.mxu0
      %v589 = vadd.f32 %v510, %v560
      %v590 = vadd.f32 %v511, %v573
      %v591 = vadd.f32 %v512, %v586
      %v592 = vld [vmem:[#allocation2] sm:$0xff]
      %s593 = scalar_lea.vmem %s2, 16
      %v594 = vld [vmem:[%s593] sm:$0xf]
      %596 = vst [vmem:[#allocation1] ss:$4 sm:$0xff] %v592
      %v597 = vld.sshfl [vmem:[#allocation1] sm:$0xff pattern:$0x73625140]
      %v599 = vld.sshfl [vmem:[#allocation1 + $0x8] sm:$0xff pattern:$0x73625140]
      %v601 = vld.sshfl [vmem:[#allocation1 + $0x10] sm:$0xff pattern:$0x73625140]
      %v603 = vld.sshfl [vmem:[#allocation1 + $0x18] sm:$0xff pattern:$0x73625140]
      %605 = vrot.lane.b32.xlu0 %v597, 86
      %v606 = vpop.permute.xlu0 %605
      %607 = vrot.lane.b32.xlu0 %v599, 86
      %v608 = vpop.permute.xlu0 %607
      %609 = vrot.lane.b32.xlu0 %v601, 86
      %v610 = vpop.permute.xlu0 %609
      %611 = vrot.lane.b32.xlu0 %v603, 86
      %v612 = vpop.permute.xlu0 %611
      %vm613 = vcmask 703488
      %v614 = vsel %vm613, %v606, %v608
      %v615 = vsel %vm613, %v608, %v610
      %v616 = vsel %vm613, %v610, %v612
      %v618 = vsel %vm328, %v594, 0
      %v621 = vsel %vm332, %v614, 0
      %v624 = vsel %vm332, %v615, 0
      %v627 = vsel %vm332, %v616, 0
      %629 = vmatpush.bf16.msra.mxu0 0
      %630 = vmatpush.bf16.msra.mxu0 0
      %631 = vmatpush.bf16.msra.mxu0 0
      %632 = vmatpush.bf16.msra.mxu0 0
      %633 = vmatpush.bf16.msra.mxu0 0
      %634 = vmatpush.bf16.msra.mxu0 0
      %635 = vmatpush.bf16.msra.mxu0 0
      %636 = vmatpush.bf16.msra.mxu0 %v621
      %637 = vmatmul.bf16.gmra.mxu0 %v618
      %v638 = vpop.f32.mrf.mxu0
      %v639 = vadd.f32 0.0, %v638
      %v640 = vpop.f32.mrf.mxu0
      %641 = vdwg.mxu0
      %642 = vmatpush.bf16.msra.mxu0 0
      %643 = vmatpush.bf16.msra.mxu0 0
      %644 = vmatpush.bf16.msra.mxu0 0
      %645 = vmatpush.bf16.msra.mxu0 0
      %646 = vmatpush.bf16.msra.mxu0 0
      %647 = vmatpush.bf16.msra.mxu0 0
      %648 = vmatpush.bf16.msra.mxu0 0
      %649 = vmatpush.bf16.msra.mxu0 %v624
      %650 = vmatmul.bf16.gmra.mxu0 %v618
      %v651 = vpop.f32.mrf.mxu0
      %v652 = vadd.f32 0.0, %v651
      %v653 = vpop.f32.mrf.mxu0
      %654 = vdwg.mxu0
      %655 = vmatpush.bf16.msra.mxu0 0
      %656 = vmatpush.bf16.msra.mxu0 0
      %657 = vmatpush.bf16.msra.mxu0 0
      %658 = vmatpush.bf16.msra.mxu0 0
      %659 = vmatpush.bf16.msra.mxu0 0
      %660 = vmatpush.bf16.msra.mxu0 0
      %661 = vmatpush.bf16.msra.mxu0 0
      %662 = vmatpush.bf16.msra.mxu0 %v627
      %663 = vmatmul.bf16.gmra.mxu0 %v618
      %v664 = vpop.f32.mrf.mxu0
      %v665 = vadd.f32 0.0, %v664
      %v666 = vpop.f32.mrf.mxu0
      %667 = vdwg.mxu0
      %v668 = vadd.f32 %v589, %v639
      %v669 = vadd.f32 %v590, %v652
      %v670 = vadd.f32 %v591, %v665
      %v671 = vld [vmem:[#allocation2] sm:$0xff]
      %s672 = scalar_lea.vmem %s2, 20
      %v673 = vld [vmem:[%s672] sm:$0xf]
      %675 = vst [vmem:[#allocation1] ss:$4 sm:$0xff] %v671
      %v676 = vld.sshfl [vmem:[#allocation1] sm:$0xff pattern:$0x73625140]
      %v678 = vld.sshfl [vmem:[#allocation1 + $0x8] sm:$0xff pattern:$0x73625140]
      %v680 = vld.sshfl [vmem:[#allocation1 + $0x10] sm:$0xff pattern:$0x73625140]
      %v682 = vld.sshfl [vmem:[#allocation1 + $0x18] sm:$0xff pattern:$0x73625140]
      %684 = vrot.lane.b32.xlu0 %v676, 84
      %v685 = vpop.permute.xlu0 %684
      %686 = vrot.lane.b32.xlu0 %v678, 84
      %v687 = vpop.permute.xlu0 %686
      %688 = vrot.lane.b32.xlu0 %v680, 84
      %v689 = vpop.permute.xlu0 %688
      %690 = vrot.lane.b32.xlu0 %v682, 84
      %v691 = vpop.permute.xlu0 %690
      %vm692 = vcmask 687104
      %v693 = vsel %vm692, %v685, %v687
      %v694 = vsel %vm692, %v687, %v689
      %v695 = vsel %vm692, %v689, %v691
      %v697 = vsel %vm328, %v673, 0
      %v700 = vsel %vm332, %v693, 0
      %v703 = vsel %vm332, %v694, 0
      %v706 = vsel %vm332, %v695, 0
      %708 = vmatpush.bf16.msra.mxu0 0
      %709 = vmatpush.bf16.msra.mxu0 0
      %710 = vmatpush.bf16.msra.mxu0 0
      %711 = vmatpush.bf16.msra.mxu0 0
      %712 = vmatpush.bf16.msra.mxu0 0
      %713 = vmatpush.bf16.msra.mxu0 0
      %714 = vmatpush.bf16.msra.mxu0 0
      %715 = vmatpush.bf16.msra.mxu0 %v700
      %716 = vmatmul.bf16.gmra.mxu0 %v697
      %v717 = vpop.f32.mrf.mxu0
      %v718 = vadd.f32 0.0, %v717
      %v719 = vpop.f32.mrf.mxu0
      %720 = vdwg.mxu0
      %721 = vmatpush.bf16.msra.mxu0 0
      %722 = vmatpush.bf16.msra.mxu0 0
      %723 = vmatpush.bf16.msra.mxu0 0
      %724 = vmatpush.bf16.msra.mxu0 0
      %725 = vmatpush.bf16.msra.mxu0 0
      %726 = vmatpush.bf16.msra.mxu0 0
      %727 = vmatpush.bf16.msra.mxu0 0
      %728 = vmatpush.bf16.msra.mxu0 %v703
      %729 = vmatmul.bf16.gmra.mxu0 %v697
      %v730 = vpop.f32.mrf.mxu0
      %v731 = vadd.f32 0.0, %v730
      %v732 = vpop.f32.mrf.mxu0
      %733 = vdwg.mxu0
      %734 = vmatpush.bf16.msra.mxu0 0
      %735 = vmatpush.bf16.msra.mxu0 0
      %736 = vmatpush.bf16.msra.mxu0 0
      %737 = vmatpush.bf16.msra.mxu0 0
      %738 = vmatpush.bf16.msra.mxu0 0
      %739 = vmatpush.bf16.msra.mxu0 0
      %740 = vmatpush.bf16.msra.mxu0 0
      %741 = vmatpush.bf16.msra.mxu0 %v706
      %742 = vmatmul.bf16.gmra.mxu0 %v697
      %v743 = vpop.f32.mrf.mxu0
      %v744 = vadd.f32 0.0, %v743
      %v745 = vpop.f32.mrf.mxu0
      %746 = vdwg.mxu0
      %v747 = vadd.f32 %v668, %v718
      %v748 = vadd.f32 %v669, %v731
      %v749 = vadd.f32 %v670, %v744
      %v750 = vld [vmem:[#allocation2] sm:$0xff]
      %s751 = scalar_lea.vmem %s2, 24
      %v752 = vld [vmem:[%s751] sm:$0xf]
      %754 = vst [vmem:[#allocation1] ss:$4 sm:$0xff] %v750
      %v755 = vld.sshfl [vmem:[#allocation1] sm:$0xff pattern:$0x73625140]
      %v757 = vld.sshfl [vmem:[#allocation1 + $0x8] sm:$0xff pattern:$0x73625140]
      %v759 = vld.sshfl [vmem:[#allocation1 + $0x10] sm:$0xff pattern:$0x73625140]
      %v761 = vld.sshfl [vmem:[#allocation1 + $0x18] sm:$0xff pattern:$0x73625140]
      %763 = vrot.lane.b32.xlu0 %v755, 48
      %v764 = vpop.permute.xlu0 %763
      %765 = vrot.lane.b32.xlu0 %v757, 48
      %v766 = vpop.permute.xlu0 %765
      %767 = vrot.lane.b32.xlu0 %v759, 48
      %v768 = vpop.permute.xlu0 %767
      %769 = vrot.lane.b32.xlu0 %v761, 48
      %v770 = vpop.permute.xlu0 %769
      %vm771 = vcmask 392192
      %v772 = vsel %vm771, %v764, %v766
      %v773 = vsel %vm771, %v766, %v768
      %v774 = vsel %vm771, %v768, %v770
      %v776 = vsel %vm328, %v752, 0
      %v779 = vsel %vm332, %v772, 0
      %v782 = vsel %vm332, %v773, 0
      %v785 = vsel %vm332, %v774, 0
      %787 = vmatpush.bf16.msra.mxu0 0
      %788 = vmatpush.bf16.msra.mxu0 0
      %789 = vmatpush.bf16.msra.mxu0 0
      %790 = vmatpush.bf16.msra.mxu0 0
      %791 = vmatpush.bf16.msra.mxu0 0
      %792 = vmatpush.bf16.msra.mxu0 0
      %793 = vmatpush.bf16.msra.mxu0 0
      %794 = vmatpush.bf16.msra.mxu0 %v779
      %795 = vmatmul.bf16.gmra.mxu0 %v776
      %v796 = vpop.f32.mrf.mxu0
      %v797 = vadd.f32 0.0, %v796
      %v798 = vpop.f32.mrf.mxu0
      %799 = vdwg.mxu0
      %800 = vmatpush.bf16.msra.mxu0 0
      %801 = vmatpush.bf16.msra.mxu0 0
      %802 = vmatpush.bf16.msra.mxu0 0
      %803 = vmatpush.bf16.msra.mxu0 0
      %804 = vmatpush.bf16.msra.mxu0 0
      %805 = vmatpush.bf16.msra.mxu0 0
      %806 = vmatpush.bf16.msra.mxu0 0
      %807 = vmatpush.bf16.msra.mxu0 %v782
      %808 = vmatmul.bf16.gmra.mxu0 %v776
      %v809 = vpop.f32.mrf.mxu0
      %v810 = vadd.f32 0.0, %v809
      %v811 = vpop.f32.mrf.mxu0
      %812 = vdwg.mxu0
      %813 = vmatpush.bf16.msra.mxu0 0
      %814 = vmatpush.bf16.msra.mxu0 0
      %815 = vmatpush.bf16.msra.mxu0 0
      %816 = vmatpush.bf16.msra.mxu0 0
      %817 = vmatpush.bf16.msra.mxu0 0
      %818 = vmatpush.bf16.msra.mxu0 0
      %819 = vmatpush.bf16.msra.mxu0 0
      %820 = vmatpush.bf16.msra.mxu0 %v785
      %821 = vmatmul.bf16.gmra.mxu0 %v776
      %v822 = vpop.f32.mrf.mxu0
      %v823 = vadd.f32 0.0, %v822
      %v824 = vpop.f32.mrf.mxu0
      %825 = vdwg.mxu0
      %v826 = vadd.f32 %v747, %v797
      %v827 = vadd.f32 %v748, %v810
      %v828 = vadd.f32 %v749, %v823
      %v829 = vld [vmem:[#allocation2] sm:$0xff]
      %s830 = scalar_lea.vmem %s2, 28
      %v831 = vld [vmem:[%s830] sm:$0xf]
      %833 = vst [vmem:[#allocation1] ss:$4 sm:$0xff] %v829
      %v834 = vld.sshfl [vmem:[#allocation1] sm:$0xff pattern:$0x73625140]
      %v836 = vld.sshfl [vmem:[#allocation1 + $0x8] sm:$0xff pattern:$0x73625140]
      %v838 = vld.sshfl [vmem:[#allocation1 + $0x10] sm:$0xff pattern:$0x73625140]
      %v840 = vld.sshfl [vmem:[#allocation1 + $0x18] sm:$0xff pattern:$0x73625140]
      %842 = vrot.lane.b32.xlu0 %v834, 46
      %v843 = vpop.permute.xlu0 %842
      %844 = vrot.lane.b32.xlu0 %v836, 46
      %v845 = vpop.permute.xlu0 %844
      %846 = vrot.lane.b32.xlu0 %v838, 46
      %v847 = vpop.permute.xlu0 %846
      %848 = vrot.lane.b32.xlu0 %v840, 46
      %v849 = vpop.permute.xlu0 %848
      %vm850 = vcmask 375808
      %v851 = vsel %vm850, %v843, %v845
      %v852 = vsel %vm850, %v845, %v847
      %v853 = vsel %vm850, %v847, %v849
      %v855 = vsel %vm328, %v831, 0
      %v858 = vsel %vm332, %v851, 0
      %v861 = vsel %vm332, %v852, 0
      %v864 = vsel %vm332, %v853, 0
      %866 = vmatpush.bf16.msra.mxu0 0
      %867 = vmatpush.bf16.msra.mxu0 0
      %868 = vmatpush.bf16.msra.mxu0 0
      %869 = vmatpush.bf16.msra.mxu0 0
      %870 = vmatpush.bf16.msra.mxu0 0
      %871 = vmatpush.bf16.msra.mxu0 0
      %872 = vmatpush.bf16.msra.mxu0 0
      %873 = vmatpush.bf16.msra.mxu0 %v858
      %874 = vmatmul.bf16.gmra.mxu0 %v855
      %v875 = vpop.f32.mrf.mxu0
      %v876 = vadd.f32 0.0, %v875
      %v877 = vpop.f32.mrf.mxu0
      %878 = vdwg.mxu0
      %879 = vmatpush.bf16.msra.mxu0 0
      %880 = vmatpush.bf16.msra.mxu0 0
      %881 = vmatpush.bf16.msra.mxu0 0
      %882 = vmatpush.bf16.msra.mxu0 0
      %883 = vmatpush.bf16.msra.mxu0 0
      %884 = vmatpush.bf16.msra.mxu0 0
      %885 = vmatpush.bf16.msra.mxu0 0
      %886 = vmatpush.bf16.msra.mxu0 %v861
      %887 = vmatmul.bf16.gmra.mxu0 %v855
      %v888 = vpop.f32.mrf.mxu0
      %v889 = vadd.f32 0.0, %v888
      %v890 = vpop.f32.mrf.mxu0
      %891 = vdwg.mxu0
      %892 = vmatpush.bf16.msra.mxu0 0
      %893 = vmatpush.bf16.msra.mxu0 0
      %894 = vmatpush.bf16.msra.mxu0 0
      %895 = vmatpush.bf16.msra.mxu0 0
      %896 = vmatpush.bf16.msra.mxu0 0
      %897 = vmatpush.bf16.msra.mxu0 0
      %898 = vmatpush.bf16.msra.mxu0 0
      %899 = vmatpush.bf16.msra.mxu0 %v864
      %900 = vmatmul.bf16.gmra.mxu0 %v855
      %v901 = vpop.f32.mrf.mxu0
      %v902 = vadd.f32 0.0, %v901
      %v903 = vpop.f32.mrf.mxu0
      %904 = vdwg.mxu0
      %v905 = vadd.f32 %v826, %v876
      %v906 = vadd.f32 %v827, %v889
      %v907 = vadd.f32 %v828, %v902
      %v908 = vld [vmem:[#allocation2] sm:$0xff]
      %s909 = scalar_lea.vmem %s2, 32
      %v910 = vld [vmem:[%s909] sm:$0xf]
      %912 = vst [vmem:[#allocation1] ss:$4 sm:$0xff] %v908
      %v913 = vld.sshfl [vmem:[#allocation1] sm:$0xff pattern:$0x73625140]
      %v915 = vld.sshfl [vmem:[#allocation1 + $0x8] sm:$0xff pattern:$0x73625140]
      %v917 = vld.sshfl [vmem:[#allocation1 + $0x10] sm:$0xff pattern:$0x73625140]
      %v919 = vld.sshfl [vmem:[#allocation1 + $0x18] sm:$0xff pattern:$0x73625140]
      %921 = vrot.lane.b32.xlu0 %v913, 44
      %v922 = vpop.permute.xlu0 %921
      %923 = vrot.lane.b32.xlu0 %v915, 44
      %v924 = vpop.permute.xlu0 %923
      %925 = vrot.lane.b32.xlu0 %v917, 44
      %v926 = vpop.permute.xlu0 %925
      %927 = vrot.lane.b32.xlu0 %v919, 44
      %v928 = vpop.permute.xlu0 %927
      %vm929 = vcmask 359424
      %v930 = vsel %vm929, %v922, %v924
      %v931 = vsel %vm929, %v924, %v926
      %v932 = vsel %vm929, %v926, %v928
      %v934 = vsel %vm328, %v910, 0
      %v937 = vsel %vm332, %v930, 0
      %v940 = vsel %vm332, %v931, 0
      %v943 = vsel %vm332, %v932, 0
      %945 = vmatpush.bf16.msra.mxu0 0
      %946 = vmatpush.bf16.msra.mxu0 0
      %947 = vmatpush.bf16.msra.mxu0 0
      %948 = vmatpush.bf16.msra.mxu0 0
      %949 = vmatpush.bf16.msra.mxu0 0
      %950 = vmatpush.bf16.msra.mxu0 0
      %951 = vmatpush.bf16.msra.mxu0 0
      %952 = vmatpush.bf16.msra.mxu0 %v937
      %953 = vmatmul.bf16.gmra.mxu0 %v934
      %v954 = vpop.f32.mrf.mxu0
      %v955 = vadd.f32 0.0, %v954
      %v956 = vpop.f32.mrf.mxu0
      %957 = vdwg.mxu0
      %958 = vmatpush.bf16.msra.mxu0 0
      %959 = vmatpush.bf16.msra.mxu0 0
      %960 = vmatpush.bf16.msra.mxu0 0
      %961 = vmatpush.bf16.msra.mxu0 0
      %962 = vmatpush.bf16.msra.mxu0 0
      %963 = vmatpush.bf16.msra.mxu0 0
      %964 = vmatpush.bf16.msra.mxu0 0
      %965 = vmatpush.bf16.msra.mxu0 %v940
      %966 = vmatmul.bf16.gmra.mxu0 %v934
      %v967 = vpop.f32.mrf.mxu0
      %v968 = vadd.f32 0.0, %v967
      %v969 = vpop.f32.mrf.mxu0
      %970 = vdwg.mxu0
      %971 = vmatpush.bf16.msra.mxu0 0
      %972 = vmatpush.bf16.msra.mxu0 0
      %973 = vmatpush.bf16.msra.mxu0 0
      %974 = vmatpush.bf16.msra.mxu0 0
      %975 = vmatpush.bf16.msra.mxu0 0
      %976 = vmatpush.bf16.msra.mxu0 0
      %977 = vmatpush.bf16.msra.mxu0 0
      %978 = vmatpush.bf16.msra.mxu0 %v943
      %979 = vmatmul.bf16.gmra.mxu0 %v934
      %v980 = vpop.f32.mrf.mxu0
      %v981 = vadd.f32 0.0, %v980
      %v982 = vpop.f32.mrf.mxu0
      %983 = vdwg.mxu0
      %v984 = vadd.f32 %v905, %v955
      %v985 = vadd.f32 %v906, %v968
      %v986 = vadd.f32 %v907, %v981
      %v987 = vld [vmem:[%s3] sm:$0xff]
      %989 = vset.pattern.permute.xlu0 0
      %990 = vperm.xlu0 %989, %v987
      %v991 = vpop.permute.xlu0 %990
      %v993 = vadd.f32 %v984, %v991
      %v994 = vadd.f32 %v985, %v991
      %v995 = vadd.f32 %v986, %v991
      %996 = vst [vmem:[%s294] sm:$0xff] %v993
      %997 = vst [vmem:[%s294 + $0x8] sm:$0xff] %v994
      %998 = vst [vmem:[%s294 + $0x10] sm:$0xff] %v995
      %s999 = smul.u32 3, %s20
      %p1000 = scmp.lt.s32.totalorder %s19, 1
      %s1001 = scalar_select %p1000, %s19, 1
      %p1002 = scmp.lt.s32.totalorder %s999, 2
      %s1003 = scalar_select %p1002, %s999, 2
      %s1004 = smul.addr %s1001, 3
      %s1005 = sadd.s32 %s1003, %s1004
      %s1006 = smul.addr %s1005, 8
      %s1007 = scalar_lea.vmem %s4, %s1006
      // Predicated region
      $region37: #{atrous_separable_conv.1} parent=35 // pred_check
        %p1008 = pneg %p153
      $region38: #{atrous_separable_conv.1} parent=35 // pred_check_branch
        %1010 = sbr.rel (%p1008) target = $region40
      $region39: #{atrous_separable_conv.1} parent=35 // pred_region
        %s1011 = smul.u32 3, %s20
      $region40: #{atrous_separable_conv.1} parent=35 // pred_fallthru
        _
    $region36: #{atrous_separable_conv.1} parent=5 // pred_fallthru
      _
    %p1012 = scmp.le.s32.totalorder 2, %s10
    // Predicated region
    $region41: #{atrous_separable_conv.1} parent=5 // pred_check
      %p1013 = pneg %p1012
    $region42: #{atrous_separable_conv.1} parent=5 // pred_check_branch
      %1015 = sbr.rel (%p1013) target = $region44
    $region43: #{atrous_separable_conv.1} parent=5 // pred_region
      %s1016 = ssub.s32 %s10, 2
      // Predicated region
      $region45: #{atrous_separable_conv.1} parent=43 // pred_check
        %p1017 = pneg %p159
      $region46: #{atrous_separable_conv.1} parent=43 // pred_check_branch
        %1019 = sbr.rel (%p1017) target = $region48
      $region47: #{atrous_separable_conv.1} parent=43 // pred_region
        %s1020 = smul.u32 3, %s22
        %p1021 = scmp.lt.s32.totalorder %s21, 1
        %s1022 = scalar_select %p1021, %s21, 1
        %p1023 = scmp.lt.s32.totalorder %s1020, 2
        %s1024 = scalar_select %p1023, %s1020, 2
        %s1025 = smul.addr %s1022, 3
        %s1026 = sadd.s32 %s1024, %s1025
        %s1027 = smul.addr %s1026, 8
        %s1028 = scalar_lea.vmem %s4, %s1027
      $region48: #{atrous_separable_conv.1} parent=43 // pred_fallthru
        _
    $region44: #{atrous_separable_conv.1} parent=5 // pred_fallthru
      _
  $region6: #{atrous_separable_conv.1} parent=0 // loop_footer
    %s14 = sadd.s32 1, %s10
  $region7: #{atrous_separable_conv.1} parent=0 // loop_footer_branch
    %9 = sbr.rel target = $region3
  $region8: #{atrous_separable_conv.1} parent=0 // loop_exit
    _

</llo_original>
